<compile_context>
chip_gen: v6e
topology: v6e:2x2x1
jax: 0.10.0
libtpu: 0.0.40
codegen_flags: <defaults>
</compile_context>

<pallas_src>
import jax
import jax.numpy as jnp
from jax.experimental import pallas as pl
from jax.experimental.pallas import tpu as pltpu

EPS = 1e-5  # torch.nn.LayerNorm default eps
_INV_SQRT2 = 0.7071067811865476


def _gelu(x):
    # Exact (erf-based) GELU, matching torch.nn.GELU() default. erf runs on the
    # EUP slot, which is otherwise idle here.
    return 0.5 * x * (1.0 + jax.lax.erf(x * _INV_SQRT2))


def encoder_kernel(x_ref, w1b_ref, b1_ref, w2b_ref, b2_ref, avg_ref,
                   g_ref, be_ref, o_ref):
    x = x_ref[...]            # (bt, N*D) lane-dense
    w1b = w1b_ref[...]        # (N*D, N*D) = kron(I_N, W1^T)  block-diagonal
    b1 = b1_ref[...]          # (1, N*D)   b1 tiled over patches
    w2b = w2b_ref[...]        # (N*D, N*D) = kron(W2^T, I_D)
    b2 = b2_ref[...]          # (1, N*D)   b2 repeated over d_model
    avg = avg_ref[...]        # (N*D, N*D) segment-mean matrix kron(I_N, 1/D)
    gamma = g_ref[...]        # (1, N*D)   LN weight tiled over patches
    beta = be_ref[...]        # (1, N*D)   LN bias tiled over patches

    def layernorm(y):
        # Two-pass LayerNorm over each contiguous D-lane group, entirely
        # lane-dense: the per-group mean (broadcast back over its D lanes)
        # is computed on the MXU with the segment-mean matrix -> no XLU
        # relayout, no cross-lane reduce on the critical VPU path.
        mu = jnp.dot(y, avg, preferred_element_type=jnp.float32)
        c = y - mu
        var = jnp.dot(c * c, avg, preferred_element_type=jnp.float32)
        return c * jax.lax.rsqrt(var + EPS) * gamma + beta

    # ff1: Linear(d_model->d_model) + GELU (+identity dropout), residual, LN.
    h = _gelu(jnp.dot(x, w1b, preferred_element_type=jnp.float32) + b1)
    y0 = layernorm(h + x)

    # ff2: permute -> Linear(enc_in->enc_in) -> GELU -> permute back, expressed
    # as one full-tile matmul on the flat layout (result already lane-dense).
    y1 = _gelu(jnp.dot(y0, w2b, preferred_element_type=jnp.float32) + b2)

    # gate, residual, LN, lane-dense store.
    y2 = layernorm(y1 * y0 + x)
    o_ref[...] = y2.astype(o_ref.dtype)


def _choose_batch_tile(B):
    # >= 4 grid steps for DMA/compute overlap when B is big enough, with tiles
    # of at most 512 rows (512 KiB at N*D=256).  Tiny B: single step (nothing
    # to overlap; extra steps just add ~0.35 us of pipeline bookkeeping each).
    if B < 32:
        return B
    target = min(512, max(8, B // 4))
    bt = target
    while B % bt:
        bt -= 1
    return bt


def encoder_forward(x, w1, b1, w2, b2, gamma, beta, *, batch_tile=None):
    B, N, D = x.shape
    ND = N * D
    if batch_tile is None:
        batch_tile = _choose_batch_tile(B)
    assert B % batch_tile == 0

    dt = x.dtype
    eye_n = jnp.eye(N, dtype=dt)
    eye_d = jnp.eye(D, dtype=dt)

    # One-time XLA-side weight preparation (tiny).
    x_flat = x.reshape(B, ND)                                   # metadata-only
    w1big = jnp.kron(eye_n, jnp.transpose(w1))                  # (ND, ND)
    w2big = jnp.kron(jnp.transpose(w2), eye_d)                  # (ND, ND)
    avg = jnp.kron(eye_n, jnp.full((D, D), 1.0 / D, dtype=dt))  # (ND, ND)
    b1e = jnp.tile(b1, N).reshape(1, ND)
    b2e = jnp.repeat(b2, D).reshape(1, ND)
    ge = jnp.tile(gamma, N).reshape(1, ND)
    be = jnp.tile(beta, N).reshape(1, ND)

    grid = (B // batch_tile,)
    out_flat = pl.pallas_call(
        encoder_kernel,
        out_shape=jax.ShapeDtypeStruct((B, ND), dt),
        grid=grid,
        in_specs=[
            pl.BlockSpec((batch_tile, ND), lambda i: (i, 0)),   # x (lane-dense)
            pl.BlockSpec((ND, ND), lambda i: (0, 0)),           # W1big
            pl.BlockSpec((1, ND), lambda i: (0, 0)),            # b1 (expanded)
            pl.BlockSpec((ND, ND), lambda i: (0, 0)),           # W2big
            pl.BlockSpec((1, ND), lambda i: (0, 0)),            # b2 (expanded)
            pl.BlockSpec((ND, ND), lambda i: (0, 0)),           # segment-mean
            pl.BlockSpec((1, ND), lambda i: (0, 0)),            # gamma (tiled)
            pl.BlockSpec((1, ND), lambda i: (0, 0)),            # beta  (tiled)
        ],
        out_specs=pl.BlockSpec((batch_tile, ND), lambda i: (i, 0)),
        compiler_params=pltpu.CompilerParams(
            dimension_semantics=("parallel",),
            # 2x double-buffered (batch_tile, 256) in/out blocks + three
            # 256x256 f32 weight tiles + ~6 live full-tile intermediates is
            # well under 32 MiB for batch_tile <= 512; fits all generations
            # (16 MiB v5e default raised, <= half of v7x's 64 MiB physical).
            vmem_limit_bytes=32 * 1024 * 1024,
        ),
    )(x_flat, w1big, b1e, w2big, b2e, avg, ge, be)

    return out_flat.reshape(B, N, D)                            # metadata-only


if __name__ == "__main__":
    # Small shapes consistent with the module: batch=2, enc_in=8, d_model=32.
    B, N, D = 2, 8, 32
    key = jax.random.PRNGKey(0)
    kx, kw1, kb1, kw2, kb2, kg, kb = jax.random.split(key, 7)

    x = jax.random.normal(kx, (B, N, D), dtype=jnp.float32)

    # Deterministic parameter init (shapes from Encoder.__init__).
    w1 = jax.random.normal(kw1, (D, D), dtype=jnp.float32) * 0.1   # ff1 Linear(d_model, d_model)
    b1 = jax.random.normal(kb1, (D,), dtype=jnp.float32) * 0.1
    w2 = jax.random.normal(kw2, (N, N), dtype=jnp.float32) * 0.1   # ff2 Linear(enc_in, enc_in)
    b2 = jax.random.normal(kb2, (N,), dtype=jnp.float32) * 0.1
    gamma = 1.0 + 0.05 * jax.random.normal(kg, (D,), dtype=jnp.float32)  # norm1.weight
    beta = 0.05 * jax.random.normal(kb, (D,), dtype=jnp.float32)          # norm1.bias
    # norm2 is defined in the PyTorch module but never used in forward();
    # dropout is identity in eval mode.

    out = encoder_forward(x, w1, b1, w2, b2, gamma, beta)
    jax.block_until_ready(out)

    # Pure-JAX reference (same math outside Pallas).
    def ref(x):
        h = jax.nn.gelu(x @ w1.T + b1, approximate=False) + x
        mu = h.mean(-1, keepdims=True)
        v = ((h - mu) ** 2).mean(-1, keepdims=True)
        y0 = (h - mu) / jnp.sqrt(v + EPS) * gamma + beta
        y1p = jax.nn.gelu(jnp.swapaxes(y0, 1, 2) @ w2.T + b2, approximate=False)
        y1 = jnp.swapaxes(y1p, 1, 2)
        y2 = y1 * y0 + x
        mu2 = y2.mean(-1, keepdims=True)
        v2 = ((y2 - mu2) ** 2).mean(-1, keepdims=True)
        return (y2 - mu2) / jnp.sqrt(v2 + EPS) * gamma + beta

    expected = ref(x)
    assert jnp.allclose(out, expected, atol=1e-4, rtol=1e-4), "mismatch vs JAX reference"
    print("KERNEL_OK")
</pallas_src>

<mosaic_0001>
module attributes {stable_mosaic.version = 11 : i64} {
  func.func @encoder_kernel(%arg0: i32, %arg1: memref<2x256xf32, #tpu.memory_space<vmem>>, %arg2: memref<256x256xf32, #tpu.memory_space<vmem>>, %arg3: memref<1x256xf32, #tpu.memory_space<vmem>>, %arg4: memref<256x256xf32, #tpu.memory_space<vmem>>, %arg5: memref<1x256xf32, #tpu.memory_space<vmem>>, %arg6: memref<256x256xf32, #tpu.memory_space<vmem>>, %arg7: memref<1x256xf32, #tpu.memory_space<vmem>>, %arg8: memref<1x256xf32, #tpu.memory_space<vmem>>, %arg9: memref<2x256xf32, #tpu.memory_space<vmem>>) attributes {dimension_semantics = [#tpu.dimension_semantics<parallel>], iteration_bounds = array<i64: 1>, scalar_prefetch = 0 : i64, scratch_operands = 0 : i64, tpu.core_type = #tpu.core_type<tc>, window_params = [{transform_indices = @transform_0, window_bounds = array<i64: 2, 256>}, {pipeline_mode = #tpu.pipeline_mode<synchronous>, transform_indices = @transform_1, window_bounds = array<i64: 256, 256>}, {pipeline_mode = #tpu.pipeline_mode<synchronous>, transform_indices = @transform_2, window_bounds = array<i64: 1, 256>}, {pipeline_mode = #tpu.pipeline_mode<synchronous>, transform_indices = @transform_3, window_bounds = array<i64: 256, 256>}, {pipeline_mode = #tpu.pipeline_mode<synchronous>, transform_indices = @transform_4, window_bounds = array<i64: 1, 256>}, {pipeline_mode = #tpu.pipeline_mode<synchronous>, transform_indices = @transform_5, window_bounds = array<i64: 256, 256>}, {pipeline_mode = #tpu.pipeline_mode<synchronous>, transform_indices = @transform_6, window_bounds = array<i64: 1, 256>}, {pipeline_mode = #tpu.pipeline_mode<synchronous>, transform_indices = @transform_7, window_bounds = array<i64: 1, 256>}, {transform_indices = @transform_8, window_bounds = array<i64: 2, 256>}]} {
    %c0 = arith.constant 0 : index
    %c0_0 = arith.constant 0 : index
    %0 = vector.load %arg1[%c0, %c0_0] : memref<2x256xf32, #tpu.memory_space<vmem>>, vector<2x256xf32>
    %c0_1 = arith.constant 0 : index
    %c0_2 = arith.constant 0 : index
    %1 = vector.load %arg2[%c0_1, %c0_2] : memref<256x256xf32, #tpu.memory_space<vmem>>, vector<256x256xf32>
    %c0_3 = arith.constant 0 : index
    %c0_4 = arith.constant 0 : index
    %2 = vector.load %arg3[%c0_3, %c0_4] : memref<1x256xf32, #tpu.memory_space<vmem>>, vector<1x256xf32>
    %c0_5 = arith.constant 0 : index
    %c0_6 = arith.constant 0 : index
    %3 = vector.load %arg4[%c0_5, %c0_6] : memref<256x256xf32, #tpu.memory_space<vmem>>, vector<256x256xf32>
    %c0_7 = arith.constant 0 : index
    %c0_8 = arith.constant 0 : index
    %4 = vector.load %arg5[%c0_7, %c0_8] : memref<1x256xf32, #tpu.memory_space<vmem>>, vector<1x256xf32>
    %c0_9 = arith.constant 0 : index
    %c0_10 = arith.constant 0 : index
    %5 = vector.load %arg6[%c0_9, %c0_10] : memref<256x256xf32, #tpu.memory_space<vmem>>, vector<256x256xf32>
    %c0_11 = arith.constant 0 : index
    %c0_12 = arith.constant 0 : index
    %6 = vector.load %arg7[%c0_11, %c0_12] : memref<1x256xf32, #tpu.memory_space<vmem>>, vector<1x256xf32>
    %c0_13 = arith.constant 0 : index
    %c0_14 = arith.constant 0 : index
    %7 = vector.load %arg8[%c0_13, %c0_14] : memref<1x256xf32, #tpu.memory_space<vmem>>, vector<1x256xf32>
    %cst = arith.constant dense<0.000000e+00> : vector<2x256xf32>
    %8 = tpu.matmul %0, %1, %cst {dimension_numbers = #tpu.dot_dimension_numbers<[1], [0], [0], [1], [0, 0, 1, 1], [], []>} : vector<2x256xf32>, vector<256x256xf32>, vector<2x256xf32> -> vector<2x256xf32>
    %9 = vector.broadcast %2 : vector<1x256xf32> to vector<2x256xf32>
    %10 = arith.addf %8, %9 : vector<2x256xf32>
    %cst_15 = arith.constant 5.000000e-01 : f32
    %11 = vector.broadcast %cst_15 : f32 to vector<2x256xf32>
    %12 = arith.mulf %11, %10 : vector<2x256xf32>
    %cst_16 = arith.constant 0.707106769 : f32
    %13 = vector.broadcast %cst_16 : f32 to vector<2x256xf32>
    %14 = arith.mulf %10, %13 : vector<2x256xf32>
    %15 = math.erf %14 : vector<2x256xf32>
    %cst_17 = arith.constant 1.000000e+00 : f32
    %16 = vector.broadcast %cst_17 : f32 to vector<2x256xf32>
    %17 = arith.addf %16, %15 : vector<2x256xf32>
    %18 = arith.mulf %12, %17 : vector<2x256xf32>
    %19 = arith.addf %18, %0 : vector<2x256xf32>
    %cst_18 = arith.constant dense<0.000000e+00> : vector<2x256xf32>
    %20 = tpu.matmul %19, %5, %cst_18 {dimension_numbers = #tpu.dot_dimension_numbers<[1], [0], [0], [1], [0, 0, 1, 1], [], []>} : vector<2x256xf32>, vector<256x256xf32>, vector<2x256xf32> -> vector<2x256xf32>
    %21 = arith.subf %19, %20 : vector<2x256xf32>
    %22 = arith.mulf %21, %21 : vector<2x256xf32>
    %cst_19 = arith.constant dense<0.000000e+00> : vector<2x256xf32>
    %23 = tpu.matmul %22, %5, %cst_19 {dimension_numbers = #tpu.dot_dimension_numbers<[1], [0], [0], [1], [0, 0, 1, 1], [], []>} : vector<2x256xf32>, vector<256x256xf32>, vector<2x256xf32> -> vector<2x256xf32>
    %cst_20 = arith.constant 9.99999974E-6 : f32
    %24 = vector.broadcast %cst_20 : f32 to vector<2x256xf32>
    %25 = arith.addf %23, %24 : vector<2x256xf32>
    %26 = math.rsqrt %25 : vector<2x256xf32>
    %27 = arith.mulf %21, %26 : vector<2x256xf32>
    %28 = vector.broadcast %6 : vector<1x256xf32> to vector<2x256xf32>
    %29 = arith.mulf %27, %28 : vector<2x256xf32>
    %30 = vector.broadcast %7 : vector<1x256xf32> to vector<2x256xf32>
    %31 = arith.addf %29, %30 : vector<2x256xf32>
    %cst_21 = arith.constant dense<0.000000e+00> : vector<2x256xf32>
    %32 = tpu.matmul %31, %3, %cst_21 {dimension_numbers = #tpu.dot_dimension_numbers<[1], [0], [0], [1], [0, 0, 1, 1], [], []>} : vector<2x256xf32>, vector<256x256xf32>, vector<2x256xf32> -> vector<2x256xf32>
    %33 = vector.broadcast %4 : vector<1x256xf32> to vector<2x256xf32>
    %34 = arith.addf %32, %33 : vector<2x256xf32>
    %cst_22 = arith.constant 5.000000e-01 : f32
    %35 = vector.broadcast %cst_22 : f32 to vector<2x256xf32>
    %36 = arith.mulf %35, %34 : vector<2x256xf32>
    %cst_23 = arith.constant 0.707106769 : f32
    %37 = vector.broadcast %cst_23 : f32 to vector<2x256xf32>
    %38 = arith.mulf %34, %37 : vector<2x256xf32>
    %39 = math.erf %38 : vector<2x256xf32>
    %cst_24 = arith.constant 1.000000e+00 : f32
    %40 = vector.broadcast %cst_24 : f32 to vector<2x256xf32>
    %41 = arith.addf %40, %39 : vector<2x256xf32>
    %42 = arith.mulf %36, %41 : vector<2x256xf32>
    %43 = arith.mulf %42, %31 : vector<2x256xf32>
    %44 = arith.addf %43, %0 : vector<2x256xf32>
    %cst_25 = arith.constant dense<0.000000e+00> : vector<2x256xf32>
    %45 = tpu.matmul %44, %5, %cst_25 {dimension_numbers = #tpu.dot_dimension_numbers<[1], [0], [0], [1], [0, 0, 1, 1], [], []>} : vector<2x256xf32>, vector<256x256xf32>, vector<2x256xf32> -> vector<2x256xf32>
    %46 = arith.subf %44, %45 : vector<2x256xf32>
    %47 = arith.mulf %46, %46 : vector<2x256xf32>
    %cst_26 = arith.constant dense<0.000000e+00> : vector<2x256xf32>
    %48 = tpu.matmul %47, %5, %cst_26 {dimension_numbers = #tpu.dot_dimension_numbers<[1], [0], [0], [1], [0, 0, 1, 1], [], []>} : vector<2x256xf32>, vector<256x256xf32>, vector<2x256xf32> -> vector<2x256xf32>
    %cst_27 = arith.constant 9.99999974E-6 : f32
    %49 = vector.broadcast %cst_27 : f32 to vector<2x256xf32>
    %50 = arith.addf %48, %49 : vector<2x256xf32>
    %51 = math.rsqrt %50 : vector<2x256xf32>
    %52 = arith.mulf %46, %51 : vector<2x256xf32>
    %53 = vector.broadcast %6 : vector<1x256xf32> to vector<2x256xf32>
    %54 = arith.mulf %52, %53 : vector<2x256xf32>
    %55 = vector.broadcast %7 : vector<1x256xf32> to vector<2x256xf32>
    %56 = arith.addf %54, %55 : vector<2x256xf32>
    %c0_28 = arith.constant 0 : index
    %c0_29 = arith.constant 0 : index
    %57 = vector.load %arg9[%c0_28, %c0_29] : memref<2x256xf32, #tpu.memory_space<vmem>>, vector<2x256xf32>
    tpu.vector_store %arg9[%c0_28, %c0_29], %56 {strides = array<i32>} : memref<2x256xf32, #tpu.memory_space<vmem>>, vector<2x256xf32>,
    return
  }
  func.func @transform_0(%arg0: i32) -> (i32, i32) {
    %c0_i32 = arith.constant 0 : i32
    %c0_i32_0 = arith.constant 0 : i32
    return %arg0, %c0_i32 : i32, i32
  }
  func.func @transform_1(%arg0: i32) -> (i32, i32) {
    %c0_i32 = arith.constant 0 : i32
    %c0_i32_0 = arith.constant 0 : i32
    %c0_i32_1 = arith.constant 0 : i32
    return %c0_i32, %c0_i32_0 : i32, i32
  }
  func.func @transform_2(%arg0: i32) -> (i32, i32) {
    %c0_i32 = arith.constant 0 : i32
    %c0_i32_0 = arith.constant 0 : i32
    %c0_i32_1 = arith.constant 0 : i32
    return %c0_i32, %c0_i32_0 : i32, i32
  }
  func.func @transform_3(%arg0: i32) -> (i32, i32) {
    %c0_i32 = arith.constant 0 : i32
    %c0_i32_0 = arith.constant 0 : i32
    %c0_i32_1 = arith.constant 0 : i32
    return %c0_i32, %c0_i32_0 : i32, i32
  }
  func.func @transform_4(%arg0: i32) -> (i32, i32) {
    %c0_i32 = arith.constant 0 : i32
    %c0_i32_0 = arith.constant 0 : i32
    %c0_i32_1 = arith.constant 0 : i32
    return %c0_i32, %c0_i32_0 : i32, i32
  }
  func.func @transform_5(%arg0: i32) -> (i32, i32) {
    %c0_i32 = arith.constant 0 : i32
    %c0_i32_0 = arith.constant 0 : i32
    %c0_i32_1 = arith.constant 0 : i32
    return %c0_i32, %c0_i32_0 : i32, i32
  }
  func.func @transform_6(%arg0: i32) -> (i32, i32) {
    %c0_i32 = arith.constant 0 : i32
    %c0_i32_0 = arith.constant 0 : i32
    %c0_i32_1 = arith.constant 0 : i32
    return %c0_i32, %c0_i32_0 : i32, i32
  }
  func.func @transform_7(%arg0: i32) -> (i32, i32) {
    %c0_i32 = arith.constant 0 : i32
    %c0_i32_0 = arith.constant 0 : i32
    %c0_i32_1 = arith.constant 0 : i32
    return %c0_i32, %c0_i32_0 : i32, i32
  }
  func.func @transform_8(%arg0: i32) -> (i32, i32) {
    %c0_i32 = arith.constant 0 : i32
    %c0_i32_0 = arith.constant 0 : i32
    return %arg0, %c0_i32 : i32, i32
  }
}

</mosaic_0001>

<llo_original>
// kernel: tpu_custom_call.1
$region0: #{tpu_custom_call.1}
  #allocation0 [shape = 'u32[]', space=smem, size = 0x4, offset = 0x4, fixed_abs, tag = 'smem constant byte address 0x4 - core index']
  #allocation1 [shape = 'u32[144,128]{1,0:T(1,128)}', space=vmem, size = 0x12000, scoped, tag = 'internal scratch']
  %s0 = inlined_call_operand.hbm [shape: f32[2,256], index: 0, kind: input, shape index: {}]
  %s1 = inlined_call_operand.hbm [shape: f32[256,256], index: 1, kind: input, shape index: {}]
  %s2 = inlined_call_operand.vmem [shape: f32[1,256], index: 2, kind: input, shape index: {}]
  %s3 = inlined_call_operand.hbm [shape: f32[256,256], index: 3, kind: input, shape index: {}]
  %s4 = inlined_call_operand.vmem [shape: f32[1,256], index: 4, kind: input, shape index: {}]
  %s5 = inlined_call_operand.hbm [shape: f32[256,256], index: 5, kind: input, shape index: {}]
  %s6 = inlined_call_operand.vmem [shape: f32[1,256], index: 6, kind: input, shape index: {}]
  %s7 = inlined_call_operand.vmem [shape: f32[1,256], index: 7, kind: input, shape index: {}]
  %s8 = inlined_call_operand.hbm [shape: f32[2,256], index: 8, kind: output, shape index: {}]
  %s9 = sld [smem:[#allocation0]]
  $region58: #{tpu_custom_call.1} parent=0
    _
  %s11 = ssub.s32 1, %s9
  %s12 = scalar_select 0, %s11, %s9
  $region1: #{tpu_custom_call.1} parent=0
    #allocation2 [shape = 'u8[2048]{0}', space=vmem, size = 0x800, scoped, tag = 'input window, operand 0, single buffered']
    #allocation3 [shape = 's32[1]{0}', space=sflag, size = 0x4, scoped, tag = 'scoped memory for tpu_custom_call.1']
    #allocation4 [shape = 's32[1]{0}', space=sflag, size = 0x4, scoped, tag = 'scoped memory for tpu_custom_call.1']
    #allocation5 [shape = 'u8[262144]{0}', space=vmem, size = 0x40000, scoped, tag = 'input window, operand 1, single buffered']
    #allocation6 [shape = 's32[1]{0}', space=sflag, size = 0x4, scoped, tag = 'scoped memory for tpu_custom_call.1']
    #allocation7 [shape = 'u8[262144]{0}', space=vmem, size = 0x40000, scoped, tag = 'input window, operand 3, single buffered']
    #allocation8 [shape = 'u8[262144]{0}', space=vmem, size = 0x40000, scoped, tag = 'input window, operand 5, single buffered']
    #allocation9 [shape = 's32[1]{0}', space=sflag, size = 0x4, scoped, tag = 'scoped memory for tpu_custom_call.1']
    #allocation10 [shape = 'u8[2048]{0}', space=vmem, size = 0x800, scoped, tag = 'output window, operand 0, single buffered']
    %13 = vsyncpa [#allocation3], 0
    %14 = vsyncpa [#allocation6], 0
    %15 = vsyncpa [#allocation9], 0
    %16 = vsyncpa [#allocation4], 0
    // Predicated region
    $region2: #{tpu_custom_call.1} parent=1 // pred_check
      _
    $region3: #{tpu_custom_call.1} parent=1 // pred_check_branch
      %18 = sbr.rel (0) target = $region5
    $region4: #{tpu_custom_call.1} parent=1 // pred_region
      %s20 = ssub.s32 64, 64
      %21 = vsyncadd [#allocation3], %s20
      %s23 = sshll.u32 [#allocation2], 4
      %s24 = int_to_ptr.vmem [resolvable:$true] %s23
      %26 = dma.hbm_to_vmem [thread:$0]  %s0, 64, %s24, [#allocation3]
    $region5: #{tpu_custom_call.1} parent=1 // pred_fallthru
      _
    // Predicated region
    $region6: #{tpu_custom_call.1} parent=1 // pred_check
      _
    $region7: #{tpu_custom_call.1} parent=1 // pred_check_branch
      %28 = sbr.rel (0) target = $region9
    $region8: #{tpu_custom_call.1} parent=1 // pred_region
      %s30 = ssub.s32 8192, 8192
      %31 = vsyncadd [#allocation6], %s30
      %s32 = sshll.u32 [#allocation5], 4
      %s33 = int_to_ptr.vmem [resolvable:$true] %s32
      %38 = dma.hbm_to_vmem [thread:$0]  %s1, 8192, %s33, [#allocation6], 256, 256, 16
    $region9: #{tpu_custom_call.1} parent=1 // pred_fallthru
      _
    // Predicated region
    $region10: #{tpu_custom_call.1} parent=1 // pred_check
      _
    $region11: #{tpu_custom_call.1} parent=1 // pred_check_branch
      %40 = sbr.rel (0) target = $region13
    $region12: #{tpu_custom_call.1} parent=1 // pred_region
      _
    $region13: #{tpu_custom_call.1} parent=1 // pred_fallthru
      _
    // Predicated region
    $region14: #{tpu_custom_call.1} parent=1 // pred_check
      _
    $region15: #{tpu_custom_call.1} parent=1 // pred_check_branch
      %42 = sbr.rel (0) target = $region17
    $region16: #{tpu_custom_call.1} parent=1 // pred_region
      %s44 = ssub.s32 8192, 8192
      %45 = vsyncadd [#allocation6], %s44
      %s46 = sshll.u32 [#allocation7], 4
      %s47 = int_to_ptr.vmem [resolvable:$true] %s46
      %52 = dma.hbm_to_vmem [thread:$0]  %s3, 8192, %s47, [#allocation6], 256, 256, 16
    $region17: #{tpu_custom_call.1} parent=1 // pred_fallthru
      _
    // Predicated region
    $region18: #{tpu_custom_call.1} parent=1 // pred_check
      _
    $region19: #{tpu_custom_call.1} parent=1 // pred_check_branch
      %54 = sbr.rel (0) target = $region21
    $region20: #{tpu_custom_call.1} parent=1 // pred_region
      _
    $region21: #{tpu_custom_call.1} parent=1 // pred_fallthru
      _
    // Predicated region
    $region22: #{tpu_custom_call.1} parent=1 // pred_check
      _
    $region23: #{tpu_custom_call.1} parent=1 // pred_check_branch
      %56 = sbr.rel (0) target = $region25
    $region24: #{tpu_custom_call.1} parent=1 // pred_region
      %s58 = ssub.s32 8192, 8192
      %59 = vsyncadd [#allocation9], %s58
      %s60 = sshll.u32 [#allocation8], 4
      %s61 = int_to_ptr.vmem [resolvable:$true] %s60
      %66 = dma.hbm_to_vmem [thread:$0]  %s5, 8192, %s61, [#allocation9], 256, 256, 16
    $region25: #{tpu_custom_call.1} parent=1 // pred_fallthru
      _
    // Predicated region
    $region26: #{tpu_custom_call.1} parent=1 // pred_check
      _
    $region27: #{tpu_custom_call.1} parent=1 // pred_check_branch
      %68 = sbr.rel (0) target = $region29
    $region28: #{tpu_custom_call.1} parent=1 // pred_region
      _
    $region29: #{tpu_custom_call.1} parent=1 // pred_fallthru
      _
    // Predicated region
    $region30: #{tpu_custom_call.1} parent=1 // pred_check
      _
    $region31: #{tpu_custom_call.1} parent=1 // pred_check_branch
      %70 = sbr.rel (0) target = $region33
    $region32: #{tpu_custom_call.1} parent=1 // pred_region
      _
    $region33: #{tpu_custom_call.1} parent=1 // pred_fallthru
      _
    // Predicated region
    $region34: #{tpu_custom_call.1} parent=1 // pred_check
      _
    $region35: #{tpu_custom_call.1} parent=1 // pred_check_branch
      %72 = sbr.rel (0) target = $region37
    $region36: #{tpu_custom_call.1} parent=1 // pred_region
      %73 = dma.done [#allocation3], 64
    $region37: #{tpu_custom_call.1} parent=1 // pred_fallthru
      _
    // Predicated region
    $region38: #{tpu_custom_call.1} parent=1 // pred_check
      _
    $region39: #{tpu_custom_call.1} parent=1 // pred_check_branch
      %75 = sbr.rel (0) target = $region41
    $region40: #{tpu_custom_call.1} parent=1 // pred_region
      %76 = dma.done [#allocation6], 8192
    $region41: #{tpu_custom_call.1} parent=1 // pred_fallthru
      _
    // Predicated region
    $region42: #{tpu_custom_call.1} parent=1 // pred_check
      _
    $region43: #{tpu_custom_call.1} parent=1 // pred_check_branch
      %78 = sbr.rel (0) target = $region45
    $region44: #{tpu_custom_call.1} parent=1 // pred_region
      %79 = dma.done [#allocation6], 8192
    $region45: #{tpu_custom_call.1} parent=1 // pred_fallthru
      _
    // Predicated region
    $region46: #{tpu_custom_call.1} parent=1 // pred_check
      _
    $region47: #{tpu_custom_call.1} parent=1 // pred_check_branch
      %81 = sbr.rel (0) target = $region49
    $region48: #{tpu_custom_call.1} parent=1 // pred_region
      %82 = dma.done [#allocation9], 8192
    $region49: #{tpu_custom_call.1} parent=1 // pred_fallthru
      _
    %v83 = vld [vmem:[#allocation2] sm:$0xf]
    %v84 = vld [vmem:[#allocation5] sm:$0xff]
    %v85 = vld [vmem:[#allocation5 + $0x8] sm:$0xff]
    %v86 = vld [vmem:[#allocation5 + $0x10] sm:$0xff]
    %v87 = vld [vmem:[#allocation5 + $0x18] sm:$0xff]
    %v88 = vld [vmem:[#allocation5 + $0x20] sm:$0xff]
    %v89 = vld [vmem:[#allocation5 + $0x28] sm:$0xff]
    %v90 = vld [vmem:[#allocation5 + $0x30] sm:$0xff]
    %v91 = vld [vmem:[#allocation5 + $0x38] sm:$0xff]
    %v92 = vld [vmem:[#allocation5 + $0x40] sm:$0xff]
    %v93 = vld [vmem:[#allocation5 + $0x48] sm:$0xff]
    %v94 = vld [vmem:[#allocation5 + $0x50] sm:$0xff]
    %v95 = vld [vmem:[#allocation5 + $0x58] sm:$0xff]
    %v96 = vld [vmem:[#allocation5 + $0x60] sm:$0xff]
    %v97 = vld [vmem:[#allocation5 + $0x68] sm:$0xff]
    %v98 = vld [vmem:[#allocation5 + $0x70] sm:$0xff]
    %v99 = vld [vmem:[#allocation5 + $0x78] sm:$0xff]
    %v100 = vld [vmem:[#allocation5 + $0x80] sm:$0xff]
    %v101 = vld [vmem:[#allocation5 + $0x88] sm:$0xff]
    %v102 = vld [vmem:[#allocation5 + $0x90] sm:$0xff]
    %v103 = vld [vmem:[#allocation5 + $0x98] sm:$0xff]
    %v104 = vld [vmem:[#allocation5 + $0xa0] sm:$0xff]
    %v105 = vld [vmem:[#allocation5 + $0xa8] sm:$0xff]
    %v106 = vld [vmem:[#allocation5 + $0xb0] sm:$0xff]
    %v107 = vld [vmem:[#allocation5 + $0xb8] sm:$0xff]
    %v108 = vld [vmem:[#allocation5 + $0xc0] sm:$0xff]
    %v109 = vld [vmem:[#allocation5 + $0xc8] sm:$0xff]
    %v110 = vld [vmem:[#allocation5 + $0xd0] sm:$0xff]
    %v111 = vld [vmem:[#allocation5 + $0xd8] sm:$0xff]
    %v112 = vld [vmem:[#allocation5 + $0xe0] sm:$0xff]
    %v113 = vld [vmem:[#allocation5 + $0xe8] sm:$0xff]
    %v114 = vld [vmem:[#allocation5 + $0xf0] sm:$0xff]
    %v115 = vld [vmem:[#allocation5 + $0xf8] sm:$0xff]
    %v116 = vld [vmem:[#allocation5 + $0x100] sm:$0xff]
    %v117 = vld [vmem:[#allocation5 + $0x108] sm:$0xff]
    %v118 = vld [vmem:[#allocation5 + $0x110] sm:$0xff]
    %v119 = vld [vmem:[#allocation5 + $0x118] sm:$0xff]
    %v120 = vld [vmem:[#allocation5 + $0x120] sm:$0xff]
    %v121 = vld [vmem:[#allocation5 + $0x128] sm:$0xff]
    %v122 = vld [vmem:[#allocation5 + $0x130] sm:$0xff]
    %v123 = vld [vmem:[#allocation5 + $0x138] sm:$0xff]
    %v124 = vld [vmem:[#allocation5 + $0x140] sm:$0xff]
    %v125 = vld [vmem:[#allocation5 + $0x148] sm:$0xff]
    %v126 = vld [vmem:[#allocation5 + $0x150] sm:$0xff]
    %v127 = vld [vmem:[#allocation5 + $0x158] sm:$0xff]
    %v128 = vld [vmem:[#allocation5 + $0x160] sm:$0xff]
    %v129 = vld [vmem:[#allocation5 + $0x168] sm:$0xff]
    %v130 = vld [vmem:[#allocation5 + $0x170] sm:$0xff]
    %v131 = vld [vmem:[#allocation5 + $0x178] sm:$0xff]
    %v132 = vld [vmem:[#allocation5 + $0x180] sm:$0xff]
    %v133 = vld [vmem:[#allocation5 + $0x188] sm:$0xff]
    %v134 = vld [vmem:[#allocation5 + $0x190] sm:$0xff]
    %v135 = vld [vmem:[#allocation5 + $0x198] sm:$0xff]
    %v136 = vld [vmem:[#allocation5 + $0x1a0] sm:$0xff]
    %v137 = vld [vmem:[#allocation5 + $0x1a8] sm:$0xff]
    %v138 = vld [vmem:[#allocation5 + $0x1b0] sm:$0xff]
    %v139 = vld [vmem:[#allocation5 + $0x1b8] sm:$0xff]
    %v140 = vld [vmem:[#allocation5 + $0x1c0] sm:$0xff]
    %v141 = vld [vmem:[#allocation5 + $0x1c8] sm:$0xff]
    %v142 = vld [vmem:[#allocation5 + $0x1d0] sm:$0xff]
    %v143 = vld [vmem:[#allocation5 + $0x1d8] sm:$0xff]
    %v144 = vld [vmem:[#allocation5 + $0x1e0] sm:$0xff]
    %v145 = vld [vmem:[#allocation5 + $0x1e8] sm:$0xff]
    %v146 = vld [vmem:[#allocation5 + $0x1f0] sm:$0xff]
    %v147 = vld [vmem:[#allocation5 + $0x1f8] sm:$0xff]
    %v148 = vld [vmem:[%s2] sm:$0x3]
    %v149 = vld [vmem:[#allocation7] sm:$0xff]
    %v150 = vld [vmem:[#allocation7 + $0x8] sm:$0xff]
    %v151 = vld [vmem:[#allocation7 + $0x10] sm:$0xff]
    %v152 = vld [vmem:[#allocation7 + $0x18] sm:$0xff]
    %v153 = vld [vmem:[#allocation7 + $0x20] sm:$0xff]
    %v154 = vld [vmem:[#allocation7 + $0x28] sm:$0xff]
    %v155 = vld [vmem:[#allocation7 + $0x30] sm:$0xff]
    %v156 = vld [vmem:[#allocation7 + $0x38] sm:$0xff]
    %v157 = vld [vmem:[#allocation7 + $0x40] sm:$0xff]
    %v158 = vld [vmem:[#allocation7 + $0x48] sm:$0xff]
    %v159 = vld [vmem:[#allocation7 + $0x50] sm:$0xff]
    %v160 = vld [vmem:[#allocation7 + $0x58] sm:$0xff]
    %v161 = vld [vmem:[#allocation7 + $0x60] sm:$0xff]
    %v162 = vld [vmem:[#allocation7 + $0x68] sm:$0xff]
    %v163 = vld [vmem:[#allocation7 + $0x70] sm:$0xff]
    %v164 = vld [vmem:[#allocation7 + $0x78] sm:$0xff]
    %v165 = vld [vmem:[#allocation7 + $0x80] sm:$0xff]
    %v166 = vld [vmem:[#allocation7 + $0x88] sm:$0xff]
    %v167 = vld [vmem:[#allocation7 + $0x90] sm:$0xff]
    %v168 = vld [vmem:[#allocation7 + $0x98] sm:$0xff]
    %v169 = vld [vmem:[#allocation7 + $0xa0] sm:$0xff]
    %v170 = vld [vmem:[#allocation7 + $0xa8] sm:$0xff]
    %v171 = vld [vmem:[#allocation7 + $0xb0] sm:$0xff]
    %v172 = vld [vmem:[#allocation7 + $0xb8] sm:$0xff]
    %v173 = vld [vmem:[#allocation7 + $0xc0] sm:$0xff]
    %v174 = vld [vmem:[#allocation7 + $0xc8] sm:$0xff]
    %v175 = vld [vmem:[#allocation7 + $0xd0] sm:$0xff]
    %v176 = vld [vmem:[#allocation7 + $0xd8] sm:$0xff]
    %v177 = vld [vmem:[#allocation7 + $0xe0] sm:$0xff]
    %v178 = vld [vmem:[#allocation7 + $0xe8] sm:$0xff]
    %v179 = vld [vmem:[#allocation7 + $0xf0] sm:$0xff]
    %v180 = vld [vmem:[#allocation7 + $0xf8] sm:$0xff]
    %v181 = vld [vmem:[#allocation7 + $0x100] sm:$0xff]
    %v182 = vld [vmem:[#allocation7 + $0x108] sm:$0xff]
    %v183 = vld [vmem:[#allocation7 + $0x110] sm:$0xff]
    %v184 = vld [vmem:[#allocation7 + $0x118] sm:$0xff]
    %v185 = vld [vmem:[#allocation7 + $0x120] sm:$0xff]
    %v186 = vld [vmem:[#allocation7 + $0x128] sm:$0xff]
    %v187 = vld [vmem:[#allocation7 + $0x130] sm:$0xff]
    %v188 = vld [vmem:[#allocation7 + $0x138] sm:$0xff]
    %v189 = vld [vmem:[#allocation7 + $0x140] sm:$0xff]
    %v190 = vld [vmem:[#allocation7 + $0x148] sm:$0xff]
    %v191 = vld [vmem:[#allocation7 + $0x150] sm:$0xff]
    %v192 = vld [vmem:[#allocation7 + $0x158] sm:$0xff]
    %v193 = vld [vmem:[#allocation7 + $0x160] sm:$0xff]
    %v194 = vld [vmem:[#allocation7 + $0x168] sm:$0xff]
    %v195 = vld [vmem:[#allocation7 + $0x170] sm:$0xff]
    %v196 = vld [vmem:[#allocation7 + $0x178] sm:$0xff]
    %v197 = vld [vmem:[#allocation7 + $0x180] sm:$0xff]
    %v198 = vld [vmem:[#allocation7 + $0x188] sm:$0xff]
    %v199 = vld [vmem:[#allocation7 + $0x190] sm:$0xff]
    %v200 = vld [vmem:[#allocation7 + $0x198] sm:$0xff]
    %v201 = vld [vmem:[#allocation7 + $0x1a0] sm:$0xff]
    %v202 = vld [vmem:[#allocation7 + $0x1a8] sm:$0xff]
    %v203 = vld [vmem:[#allocation7 + $0x1b0] sm:$0xff]
    %v204 = vld [vmem:[#allocation7 + $0x1b8] sm:$0xff]
    %v205 = vld [vmem:[#allocation7 + $0x1c0] sm:$0xff]
    %v206 = vld [vmem:[#allocation7 + $0x1c8] sm:$0xff]
    %v207 = vld [vmem:[#allocation7 + $0x1d0] sm:$0xff]
    %v208 = vld [vmem:[#allocation7 + $0x1d8] sm:$0xff]
    %v209 = vld [vmem:[#allocation7 + $0x1e0] sm:$0xff]
    %v210 = vld [vmem:[#allocation7 + $0x1e8] sm:$0xff]
    %v211 = vld [vmem:[#allocation7 + $0x1f0] sm:$0xff]
    %v212 = vld [vmem:[#allocation7 + $0x1f8] sm:$0xff]
    %v213 = vld [vmem:[%s4] sm:$0x3]
    %v214 = vld [vmem:[#allocation8] sm:$0xff]
    %v215 = vld [vmem:[#allocation8 + $0x8] sm:$0xff]
    %v216 = vld [vmem:[#allocation8 + $0x10] sm:$0xff]
    %v217 = vld [vmem:[#allocation8 + $0x18] sm:$0xff]
    %v218 = vld [vmem:[#allocation8 + $0x20] sm:$0xff]
    %v219 = vld [vmem:[#allocation8 + $0x28] sm:$0xff]
    %v220 = vld [vmem:[#allocation8 + $0x30] sm:$0xff]
    %v221 = vld [vmem:[#allocation8 + $0x38] sm:$0xff]
    %v222 = vld [vmem:[#allocation8 + $0x40] sm:$0xff]
    %v223 = vld [vmem:[#allocation8 + $0x48] sm:$0xff]
    %v224 = vld [vmem:[#allocation8 + $0x50] sm:$0xff]
    %v225 = vld [vmem:[#allocation8 + $0x58] sm:$0xff]
    %v226 = vld [vmem:[#allocation8 + $0x60] sm:$0xff]
    %v227 = vld [vmem:[#allocation8 + $0x68] sm:$0xff]
    %v228 = vld [vmem:[#allocation8 + $0x70] sm:$0xff]
    %v229 = vld [vmem:[#allocation8 + $0x78] sm:$0xff]
    %v230 = vld [vmem:[#allocation8 + $0x80] sm:$0xff]
    %v231 = vld [vmem:[#allocation8 + $0x88] sm:$0xff]
    %v232 = vld [vmem:[#allocation8 + $0x90] sm:$0xff]
    %v233 = vld [vmem:[#allocation8 + $0x98] sm:$0xff]
    %v234 = vld [vmem:[#allocation8 + $0xa0] sm:$0xff]
    %v235 = vld [vmem:[#allocation8 + $0xa8] sm:$0xff]
    %v236 = vld [vmem:[#allocation8 + $0xb0] sm:$0xff]
    %v237 = vld [vmem:[#allocation8 + $0xb8] sm:$0xff]
    %v238 = vld [vmem:[#allocation8 + $0xc0] sm:$0xff]
    %v239 = vld [vmem:[#allocation8 + $0xc8] sm:$0xff]
    %v240 = vld [vmem:[#allocation8 + $0xd0] sm:$0xff]
    %v241 = vld [vmem:[#allocation8 + $0xd8] sm:$0xff]
    %v242 = vld [vmem:[#allocation8 + $0xe0] sm:$0xff]
    %v243 = vld [vmem:[#allocation8 + $0xe8] sm:$0xff]
    %v244 = vld [vmem:[#allocation8 + $0xf0] sm:$0xff]
    %v245 = vld [vmem:[#allocation8 + $0xf8] sm:$0xff]
    %v246 = vld [vmem:[#allocation8 + $0x100] sm:$0xff]
    %v247 = vld [vmem:[#allocation8 + $0x108] sm:$0xff]
    %v248 = vld [vmem:[#allocation8 + $0x110] sm:$0xff]
    %v249 = vld [vmem:[#allocation8 + $0x118] sm:$0xff]
    %v250 = vld [vmem:[#allocation8 + $0x120] sm:$0xff]
    %v251 = vld [vmem:[#allocation8 + $0x128] sm:$0xff]
    %v252 = vld [vmem:[#allocation8 + $0x130] sm:$0xff]
    %v253 = vld [vmem:[#allocation8 + $0x138] sm:$0xff]
    %v254 = vld [vmem:[#allocation8 + $0x140] sm:$0xff]
    %v255 = vld [vmem:[#allocation8 + $0x148] sm:$0xff]
    %v256 = vld [vmem:[#allocation8 + $0x150] sm:$0xff]
    %v257 = vld [vmem:[#allocation8 + $0x158] sm:$0xff]
    %v258 = vld [vmem:[#allocation8 + $0x160] sm:$0xff]
    %v259 = vld [vmem:[#allocation8 + $0x168] sm:$0xff]
    %v260 = vld [vmem:[#allocation8 + $0x170] sm:$0xff]
    %v261 = vld [vmem:[#allocation8 + $0x178] sm:$0xff]
    %v262 = vld [vmem:[#allocation8 + $0x180] sm:$0xff]
    %v263 = vld [vmem:[#allocation8 + $0x188] sm:$0xff]
    %v264 = vld [vmem:[#allocation8 + $0x190] sm:$0xff]
    %v265 = vld [vmem:[#allocation8 + $0x198] sm:$0xff]
    %v266 = vld [vmem:[#allocation8 + $0x1a0] sm:$0xff]
    %v267 = vld [vmem:[#allocation8 + $0x1a8] sm:$0xff]
    %v268 = vld [vmem:[#allocation8 + $0x1b0] sm:$0xff]
    %v269 = vld [vmem:[#allocation8 + $0x1b8] sm:$0xff]
    %v270 = vld [vmem:[#allocation8 + $0x1c0] sm:$0xff]
    %v271 = vld [vmem:[#allocation8 + $0x1c8] sm:$0xff]
    %v272 = vld [vmem:[#allocation8 + $0x1d0] sm:$0xff]
    %v273 = vld [vmem:[#allocation8 + $0x1d8] sm:$0xff]
    %v274 = vld [vmem:[#allocation8 + $0x1e0] sm:$0xff]
    %v275 = vld [vmem:[#allocation8 + $0x1e8] sm:$0xff]
    %v276 = vld [vmem:[#allocation8 + $0x1f0] sm:$0xff]
    %v277 = vld [vmem:[#allocation8 + $0x1f8] sm:$0xff]
    %v278 = vld [vmem:[%s6] sm:$0x3]
    %v279 = vld [vmem:[%s7] sm:$0x3]
    %v281 = vlaneseq
    %v282 = vshrl.u32 %v281, 7
    %v283 = vsub.s32 0, %v282
    %v284 = vrot.slane %v148, %v283
    %v285 = vlaneseq
    %v286 = vshrl.u32 %v285, 7
    %v287 = vsub.s32 1, %v286
    %v288 = vrot.slane %v148, %v287
    %v293 = vunpack.c.l.s4 1983009808
    %v294 = vunpack.c.0.s8 %v293
    %v295 = vlaneseq
    %v296 = vshrl.u32 %v295, 7
    %v297 = vsub.s32 %v294, %v296
    %v298 = vrot.slane %v83, %v297
    %v299 = vcombine.high %v298, %v298
    %302 = vmatprep.subr.mxu0 %v115
    %303 = vmatpush1.msra.mxu0 %v114
    %304 = vmatprep.subr.mxu0 %v113
    %305 = vmatpush1.msra.mxu0 %v112
    %306 = vmatprep.subr.mxu0 %v111
    %307 = vmatpush1.msra.mxu0 %v110
    %308 = vmatprep.subr.mxu0 %v109
    %309 = vmatpush1.msra.mxu0 %v108
    %310 = vmatprep.subr.mxu0 %v107
    %311 = vmatpush1.msra.mxu0 %v106
    %312 = vmatprep.subr.mxu0 %v105
    %313 = vmatpush1.msra.mxu0 %v104
    %314 = vmatprep.subr.mxu0 %v103
    %315 = vmatpush1.msra.mxu0 %v102
    %316 = vmatprep.subr.mxu0 %v101
    %317 = vmatpush1.msra.mxu0 %v100
    %318 = vmatprep.subr.mxu0 %v99
    %319 = vmatpush1.msra.mxu0 %v98
    %320 = vmatprep.subr.mxu0 %v97
    %321 = vmatpush1.msra.mxu0 %v96
    %322 = vmatprep.subr.mxu0 %v95
    %323 = vmatpush1.msra.mxu0 %v94
    %324 = vmatprep.subr.mxu0 %v93
    %325 = vmatpush1.msra.mxu0 %v92
    %326 = vmatprep.subr.mxu0 %v91
    %327 = vmatpush1.msra.mxu0 %v90
    %328 = vmatprep.subr.mxu0 %v89
    %329 = vmatpush1.msra.mxu0 %v88
    %330 = vmatprep.subr.mxu0 %v87
    %331 = vmatpush1.msra.mxu0 %v86
    %332 = vmatprep.subr.mxu0 %v85
    %333 = vmatpush1.msra.mxu0 %v84
    %334 = vmatprep.subr.mxu0 %v147
    %335 = vmatpush2.msra.mxu0 %v146
    %336 = vmatprep.subr.mxu0 %v145
    %337 = vmatpush2.msra.mxu0 %v144
    %338 = vmatprep.subr.mxu0 %v143
    %339 = vmatpush2.msra.mxu0 %v142
    %340 = vmatprep.subr.mxu0 %v141
    %341 = vmatpush2.msra.mxu0 %v140
    %342 = vmatprep.subr.mxu0 %v139
    %343 = vmatpush2.msra.mxu0 %v138
    %344 = vmatprep.subr.mxu0 %v137
    %345 = vmatpush2.msra.mxu0 %v136
    %346 = vmatprep.subr.mxu0 %v135
    %347 = vmatpush2.msra.mxu0 %v134
    %348 = vmatprep.subr.mxu0 %v133
    %349 = vmatpush2.msra.mxu0 %v132
    %350 = vmatprep.subr.mxu0 %v131
    %351 = vmatpush2.msra.mxu0 %v130
    %352 = vmatprep.subr.mxu0 %v129
    %353 = vmatpush2.msra.mxu0 %v128
    %354 = vmatprep.subr.mxu0 %v127
    %355 = vmatpush2.msra.mxu0 %v126
    %356 = vmatprep.subr.mxu0 %v125
    %357 = vmatpush2.msra.mxu0 %v124
    %358 = vmatprep.subr.mxu0 %v123
    %359 = vmatpush2.msra.mxu0 %v122
    %360 = vmatprep.subr.mxu0 %v121
    %361 = vmatpush2.msra.mxu0 %v120
    %362 = vmatprep.subr.mxu0 %v119
    %363 = vmatpush2.msra.mxu0 %v118
    %364 = vmatprep.subr.mxu0 %v117
    %365 = vmatpush2.msra.mxu0 %v116
    %366 = vmatprep.mubr.f32.mxu0 %v299
    %367 = vmatmul.mubr.f32.gmra.mxu0 %v298
    %v368 = vpop.f32.mrf.mxu0
    %v369 = vadd.f32 %v284, %v368
    %v370 = vpop.f32.mrf.mxu0
    %v371 = vadd.f32 %v288, %v370
    %372 = vdwg.mxu0
    %v373 = vmul.f32 %v369, 0.5
    %v374 = vmul.f32 %v371, 0.5
    %v375 = vmul.f32 %v369, 0.70710677
    %v376 = vmul.f32 %v371, 0.70710677
    %v377 = verf.f32.pop %v375
    %v378 = verf.f32.pop %v376
    %v379 = vadd.f32 %v377, 1.0
    %v380 = vadd.f32 %v378, 1.0
    %v381 = vmul.f32 %v373, %v379
    %v382 = vmul.f32 %v374, %v380
    %v383 = vadd.f32 %v381, %v298
    %v384 = vadd.f32 %v382, %v299
    %385 = vmatprep.subr.mxu0 %v245
    %386 = vmatpush1.msra.mxu0 %v244
    %387 = vmatprep.subr.mxu0 %v243
    %388 = vmatpush1.msra.mxu0 %v242
    %389 = vmatprep.subr.mxu0 %v241
    %390 = vmatpush1.msra.mxu0 %v240
    %391 = vmatprep.subr.mxu0 %v239
    %392 = vmatpush1.msra.mxu0 %v238
    %393 = vmatprep.subr.mxu0 %v237
    %394 = vmatpush1.msra.mxu0 %v236
    %395 = vmatprep.subr.mxu0 %v235
    %396 = vmatpush1.msra.mxu0 %v234
    %397 = vmatprep.subr.mxu0 %v233
    %398 = vmatpush1.msra.mxu0 %v232
    %399 = vmatprep.subr.mxu0 %v231
    %400 = vmatpush1.msra.mxu0 %v230
    %401 = vmatprep.subr.mxu0 %v229
    %402 = vmatpush1.msra.mxu0 %v228
    %403 = vmatprep.subr.mxu0 %v227
    %404 = vmatpush1.msra.mxu0 %v226
    %405 = vmatprep.subr.mxu0 %v225
    %406 = vmatpush1.msra.mxu0 %v224
    %407 = vmatprep.subr.mxu0 %v223
    %408 = vmatpush1.msra.mxu0 %v222
    %409 = vmatprep.subr.mxu0 %v221
    %410 = vmatpush1.msra.mxu0 %v220
    %411 = vmatprep.subr.mxu0 %v219
    %412 = vmatpush1.msra.mxu0 %v218
    %413 = vmatprep.subr.mxu0 %v217
    %414 = vmatpush1.msra.mxu0 %v216
    %415 = vmatprep.subr.mxu0 %v215
    %416 = vmatpush1.msra.mxu0 %v214
    %417 = vmatprep.subr.mxu0 %v277
    %418 = vmatpush2.msra.mxu0 %v276
    %419 = vmatprep.subr.mxu0 %v275
    %420 = vmatpush2.msra.mxu0 %v274
    %421 = vmatprep.subr.mxu0 %v273
    %422 = vmatpush2.msra.mxu0 %v272
    %423 = vmatprep.subr.mxu0 %v271
    %424 = vmatpush2.msra.mxu0 %v270
    %425 = vmatprep.subr.mxu0 %v269
    %426 = vmatpush2.msra.mxu0 %v268
    %427 = vmatprep.subr.mxu0 %v267
    %428 = vmatpush2.msra.mxu0 %v266
    %429 = vmatprep.subr.mxu0 %v265
    %430 = vmatpush2.msra.mxu0 %v264
    %431 = vmatprep.subr.mxu0 %v263
    %432 = vmatpush2.msra.mxu0 %v262
    %433 = vmatprep.subr.mxu0 %v261
    %434 = vmatpush2.msra.mxu0 %v260
    %435 = vmatprep.subr.mxu0 %v259
    %436 = vmatpush2.msra.mxu0 %v258
    %437 = vmatprep.subr.mxu0 %v257
    %438 = vmatpush2.msra.mxu0 %v256
    %439 = vmatprep.subr.mxu0 %v255
    %440 = vmatpush2.msra.mxu0 %v254
    %441 = vmatprep.subr.mxu0 %v253
    %442 = vmatpush2.msra.mxu0 %v252
    %443 = vmatprep.subr.mxu0 %v251
    %444 = vmatpush2.msra.mxu0 %v250
    %445 = vmatprep.subr.mxu0 %v249
    %446 = vmatpush2.msra.mxu0 %v248
    %447 = vmatprep.subr.mxu0 %v247
    %448 = vmatpush2.msra.mxu0 %v246
    %449 = vmatprep.mubr.f32.mxu0 %v384
    %450 = vmatmul.mubr.f32.gmra.mxu0 %v383
    %v451 = vpop.f32.mrf.mxu0
    %v452 = vadd.f32 0.0, %v451
    %v453 = vpop.f32.mrf.mxu0
    %v454 = vadd.f32 0.0, %v453
    %455 = vdwg.mxu0
    %v456 = vsub.f32 %v383, %v452
    %v457 = vsub.f32 %v384, %v454
    %v458 = vmul.f32 %v456, %v456
    %v459 = vmul.f32 %v457, %v457
    %460 = vmatprep.subr.mxu0 %v245
    %461 = vmatpush1.msra.mxu0 %v244
    %462 = vmatprep.subr.mxu0 %v243
    %463 = vmatpush1.msra.mxu0 %v242
    %464 = vmatprep.subr.mxu0 %v241
    %465 = vmatpush1.msra.mxu0 %v240
    %466 = vmatprep.subr.mxu0 %v239
    %467 = vmatpush1.msra.mxu0 %v238
    %468 = vmatprep.subr.mxu0 %v237
    %469 = vmatpush1.msra.mxu0 %v236
    %470 = vmatprep.subr.mxu0 %v235
    %471 = vmatpush1.msra.mxu0 %v234
    %472 = vmatprep.subr.mxu0 %v233
    %473 = vmatpush1.msra.mxu0 %v232
    %474 = vmatprep.subr.mxu0 %v231
    %475 = vmatpush1.msra.mxu0 %v230
    %476 = vmatprep.subr.mxu0 %v229
    %477 = vmatpush1.msra.mxu0 %v228
    %478 = vmatprep.subr.mxu0 %v227
    %479 = vmatpush1.msra.mxu0 %v226
    %480 = vmatprep.subr.mxu0 %v225
    %481 = vmatpush1.msra.mxu0 %v224
    %482 = vmatprep.subr.mxu0 %v223
    %483 = vmatpush1.msra.mxu0 %v222
    %484 = vmatprep.subr.mxu0 %v221
    %485 = vmatpush1.msra.mxu0 %v220
    %486 = vmatprep.subr.mxu0 %v219
    %487 = vmatpush1.msra.mxu0 %v218
    %488 = vmatprep.subr.mxu0 %v217
    %489 = vmatpush1.msra.mxu0 %v216
    %490 = vmatprep.subr.mxu0 %v215
    %491 = vmatpush1.msra.mxu0 %v214
    %492 = vmatprep.subr.mxu0 %v277
    %493 = vmatpush2.msra.mxu0 %v276
    %494 = vmatprep.subr.mxu0 %v275
    %495 = vmatpush2.msra.mxu0 %v274
    %496 = vmatprep.subr.mxu0 %v273
    %497 = vmatpush2.msra.mxu0 %v272
    %498 = vmatprep.subr.mxu0 %v271
    %499 = vmatpush2.msra.mxu0 %v270
    %500 = vmatprep.subr.mxu0 %v269
    %501 = vmatpush2.msra.mxu0 %v268
    %502 = vmatprep.subr.mxu0 %v267
    %503 = vmatpush2.msra.mxu0 %v266
    %504 = vmatprep.subr.mxu0 %v265
    %505 = vmatpush2.msra.mxu0 %v264
    %506 = vmatprep.subr.mxu0 %v263
    %507 = vmatpush2.msra.mxu0 %v262
    %508 = vmatprep.subr.mxu0 %v261
    %509 = vmatpush2.msra.mxu0 %v260
    %510 = vmatprep.subr.mxu0 %v259
    %511 = vmatpush2.msra.mxu0 %v258
    %512 = vmatprep.subr.mxu0 %v257
    %513 = vmatpush2.msra.mxu0 %v256
    %514 = vmatprep.subr.mxu0 %v255
    %515 = vmatpush2.msra.mxu0 %v254
    %516 = vmatprep.subr.mxu0 %v253
    %517 = vmatpush2.msra.mxu0 %v252
    %518 = vmatprep.subr.mxu0 %v251
    %519 = vmatpush2.msra.mxu0 %v250
    %520 = vmatprep.subr.mxu0 %v249
    %521 = vmatpush2.msra.mxu0 %v248
    %522 = vmatprep.subr.mxu0 %v247
    %523 = vmatpush2.msra.mxu0 %v246
    %524 = vmatprep.mubr.f32.mxu0 %v459
    %525 = vmatmul.mubr.f32.gmra.mxu0 %v458
    %v526 = vpop.f32.mrf.mxu0
    %v527 = vadd.f32 1e-05, %v526
    %v528 = vpop.f32.mrf.mxu0
    %v529 = vadd.f32 1e-05, %v528
    %530 = vdwg.mxu0
    %v531 = vrsqrt.pop %v527
    %v532 = vrsqrt.pop %v529
    %v533 = vmul.f32 %v456, %v531
    %v534 = vmul.f32 %v457, %v532
    %v536 = vlaneseq
    %v537 = vshrl.u32 %v536, 7
    %v538 = vsub.s32 0, %v537
    %v539 = vrot.slane %v278, %v538
    %v540 = vlaneseq
    %v541 = vshrl.u32 %v540, 7
    %v542 = vsub.s32 1, %v541
    %v543 = vrot.slane %v278, %v542
    %v546 = vmul.f32 %v533, %v539
    %v547 = vmul.f32 %v534, %v543
    %v549 = vlaneseq
    %v550 = vshrl.u32 %v549, 7
    %v551 = vsub.s32 0, %v550
    %v552 = vrot.slane %v279, %v551
    %v553 = vlaneseq
    %v554 = vshrl.u32 %v553, 7
    %v555 = vsub.s32 1, %v554
    %v556 = vrot.slane %v279, %v555
    %v559 = vadd.f32 %v546, %v552
    %v560 = vadd.f32 %v547, %v556
    %v562 = vlaneseq
    %v563 = vshrl.u32 %v562, 7
    %v564 = vsub.s32 0, %v563
    %v565 = vrot.slane %v213, %v564
    %v566 = vlaneseq
    %v567 = vshrl.u32 %v566, 7
    %v568 = vsub.s32 1, %v567
    %v569 = vrot.slane %v213, %v568
    %572 = vmatprep.subr.mxu0 %v180
    %573 = vmatpush1.msra.mxu0 %v179
    %574 = vmatprep.subr.mxu0 %v178
    %575 = vmatpush1.msra.mxu0 %v177
    %576 = vmatprep.subr.mxu0 %v176
    %577 = vmatpush1.msra.mxu0 %v175
    %578 = vmatprep.subr.mxu0 %v174
    %579 = vmatpush1.msra.mxu0 %v173
    %580 = vmatprep.subr.mxu0 %v172
    %581 = vmatpush1.msra.mxu0 %v171
    %582 = vmatprep.subr.mxu0 %v170
    %583 = vmatpush1.msra.mxu0 %v169
    %584 = vmatprep.subr.mxu0 %v168
    %585 = vmatpush1.msra.mxu0 %v167
    %586 = vmatprep.subr.mxu0 %v166
    %587 = vmatpush1.msra.mxu0 %v165
    %588 = vmatprep.subr.mxu0 %v164
    %589 = vmatpush1.msra.mxu0 %v163
    %590 = vmatprep.subr.mxu0 %v162
    %591 = vmatpush1.msra.mxu0 %v161
    %592 = vmatprep.subr.mxu0 %v160
    %593 = vmatpush1.msra.mxu0 %v159
    %594 = vmatprep.subr.mxu0 %v158
    %595 = vmatpush1.msra.mxu0 %v157
    %596 = vmatprep.subr.mxu0 %v156
    %597 = vmatpush1.msra.mxu0 %v155
    %598 = vmatprep.subr.mxu0 %v154
    %599 = vmatpush1.msra.mxu0 %v153
    %600 = vmatprep.subr.mxu0 %v152
    %601 = vmatpush1.msra.mxu0 %v151
    %602 = vmatprep.subr.mxu0 %v150
    %603 = vmatpush1.msra.mxu0 %v149
    %604 = vmatprep.subr.mxu0 %v212
    %605 = vmatpush2.msra.mxu0 %v211
    %606 = vmatprep.subr.mxu0 %v210
    %607 = vmatpush2.msra.mxu0 %v209
    %608 = vmatprep.subr.mxu0 %v208
    %609 = vmatpush2.msra.mxu0 %v207
    %610 = vmatprep.subr.mxu0 %v206
    %611 = vmatpush2.msra.mxu0 %v205
    %612 = vmatprep.subr.mxu0 %v204
    %613 = vmatpush2.msra.mxu0 %v203
    %614 = vmatprep.subr.mxu0 %v202
    %615 = vmatpush2.msra.mxu0 %v201
    %616 = vmatprep.subr.mxu0 %v200
    %617 = vmatpush2.msra.mxu0 %v199
    %618 = vmatprep.subr.mxu0 %v198
    %619 = vmatpush2.msra.mxu0 %v197
    %620 = vmatprep.subr.mxu0 %v196
    %621 = vmatpush2.msra.mxu0 %v195
    %622 = vmatprep.subr.mxu0 %v194
    %623 = vmatpush2.msra.mxu0 %v193
    %624 = vmatprep.subr.mxu0 %v192
    %625 = vmatpush2.msra.mxu0 %v191
    %626 = vmatprep.subr.mxu0 %v190
    %627 = vmatpush2.msra.mxu0 %v189
    %628 = vmatprep.subr.mxu0 %v188
    %629 = vmatpush2.msra.mxu0 %v187
    %630 = vmatprep.subr.mxu0 %v186
    %631 = vmatpush2.msra.mxu0 %v185
    %632 = vmatprep.subr.mxu0 %v184
    %633 = vmatpush2.msra.mxu0 %v183
    %634 = vmatprep.subr.mxu0 %v182
    %635 = vmatpush2.msra.mxu0 %v181
    %636 = vmatprep.mubr.f32.mxu0 %v560
    %637 = vmatmul.mubr.f32.gmra.mxu0 %v559
    %v638 = vpop.f32.mrf.mxu0
    %v639 = vadd.f32 %v565, %v638
    %v640 = vpop.f32.mrf.mxu0
    %v641 = vadd.f32 %v569, %v640
    %642 = vdwg.mxu0
    %v643 = vmul.f32 %v639, 0.5
    %v644 = vmul.f32 %v641, 0.5
    %v645 = vmul.f32 %v639, 0.70710677
    %v646 = vmul.f32 %v641, 0.70710677
    %v647 = verf.f32.pop %v645
    %v648 = verf.f32.pop %v646
    %v649 = vadd.f32 %v647, 1.0
    %v650 = vadd.f32 %v648, 1.0
    %v651 = vmul.f32 %v643, %v649
    %v652 = vmul.f32 %v644, %v650
    %v653 = vmul.f32 %v651, %v559
    %v654 = vmul.f32 %v652, %v560
    %v655 = vadd.f32 %v653, %v298
    %v656 = vadd.f32 %v654, %v299
    %657 = vmatprep.subr.mxu0 %v245
    %658 = vmatpush1.msra.mxu0 %v244
    %659 = vmatprep.subr.mxu0 %v243
    %660 = vmatpush1.msra.mxu0 %v242
    %661 = vmatprep.subr.mxu0 %v241
    %662 = vmatpush1.msra.mxu0 %v240
    %663 = vmatprep.subr.mxu0 %v239
    %664 = vmatpush1.msra.mxu0 %v238
    %665 = vmatprep.subr.mxu0 %v237
    %666 = vmatpush1.msra.mxu0 %v236
    %667 = vmatprep.subr.mxu0 %v235
    %668 = vmatpush1.msra.mxu0 %v234
    %669 = vmatprep.subr.mxu0 %v233
    %670 = vmatpush1.msra.mxu0 %v232
    %671 = vmatprep.subr.mxu0 %v231
    %672 = vmatpush1.msra.mxu0 %v230
    %673 = vmatprep.subr.mxu0 %v229
    %674 = vmatpush1.msra.mxu0 %v228
    %675 = vmatprep.subr.mxu0 %v227
    %676 = vmatpush1.msra.mxu0 %v226
    %677 = vmatprep.subr.mxu0 %v225
    %678 = vmatpush1.msra.mxu0 %v224
    %679 = vmatprep.subr.mxu0 %v223
    %680 = vmatpush1.msra.mxu0 %v222
    %681 = vmatprep.subr.mxu0 %v221
    %682 = vmatpush1.msra.mxu0 %v220
    %683 = vmatprep.subr.mxu0 %v219
    %684 = vmatpush1.msra.mxu0 %v218
    %685 = vmatprep.subr.mxu0 %v217
    %686 = vmatpush1.msra.mxu0 %v216
    %687 = vmatprep.subr.mxu0 %v215
    %688 = vmatpush1.msra.mxu0 %v214
    %689 = vmatprep.subr.mxu0 %v277
    %690 = vmatpush2.msra.mxu0 %v276
    %691 = vmatprep.subr.mxu0 %v275
    %692 = vmatpush2.msra.mxu0 %v274
    %693 = vmatprep.subr.mxu0 %v273
    %694 = vmatpush2.msra.mxu0 %v272
    %695 = vmatprep.subr.mxu0 %v271
    %696 = vmatpush2.msra.mxu0 %v270
    %697 = vmatprep.subr.mxu0 %v269
    %698 = vmatpush2.msra.mxu0 %v268
    %699 = vmatprep.subr.mxu0 %v267
    %700 = vmatpush2.msra.mxu0 %v266
    %701 = vmatprep.subr.mxu0 %v265
    %702 = vmatpush2.msra.mxu0 %v264
    %703 = vmatprep.subr.mxu0 %v263
    %704 = vmatpush2.msra.mxu0 %v262
    %705 = vmatprep.subr.mxu0 %v261
    %706 = vmatpush2.msra.mxu0 %v260
    %707 = vmatprep.subr.mxu0 %v259
    %708 = vmatpush2.msra.mxu0 %v258
    %709 = vmatprep.subr.mxu0 %v257
    %710 = vmatpush2.msra.mxu0 %v256
    %711 = vmatprep.subr.mxu0 %v255
    %712 = vmatpush2.msra.mxu0 %v254
    %713 = vmatprep.subr.mxu0 %v253
    %714 = vmatpush2.msra.mxu0 %v252
    %715 = vmatprep.subr.mxu0 %v251
    %716 = vmatpush2.msra.mxu0 %v250
    %717 = vmatprep.subr.mxu0 %v249
    %718 = vmatpush2.msra.mxu0 %v248
    %719 = vmatprep.subr.mxu0 %v247
    %720 = vmatpush2.msra.mxu0 %v246
    %721 = vmatprep.mubr.f32.mxu0 %v656
    %722 = vmatmul.mubr.f32.gmra.mxu0 %v655
    %v723 = vpop.f32.mrf.mxu0
    %v724 = vadd.f32 0.0, %v723
    %v725 = vpop.f32.mrf.mxu0
    %v726 = vadd.f32 0.0, %v725
    %727 = vdwg.mxu0
    %v728 = vsub.f32 %v655, %v724
    %v729 = vsub.f32 %v656, %v726
    %v730 = vmul.f32 %v728, %v728
    %v731 = vmul.f32 %v729, %v729
    %732 = vmatprep.subr.mxu0 %v245
    %733 = vmatpush1.msra.mxu0 %v244
    %734 = vmatprep.subr.mxu0 %v243
    %735 = vmatpush1.msra.mxu0 %v242
    %736 = vmatprep.subr.mxu0 %v241
    %737 = vmatpush1.msra.mxu0 %v240
    %738 = vmatprep.subr.mxu0 %v239
    %739 = vmatpush1.msra.mxu0 %v238
    %740 = vmatprep.subr.mxu0 %v237
    %741 = vmatpush1.msra.mxu0 %v236
    %742 = vmatprep.subr.mxu0 %v235
    %743 = vmatpush1.msra.mxu0 %v234
    %744 = vmatprep.subr.mxu0 %v233
    %745 = vmatpush1.msra.mxu0 %v232
    %746 = vmatprep.subr.mxu0 %v231
    %747 = vmatpush1.msra.mxu0 %v230
    %748 = vmatprep.subr.mxu0 %v229
    %749 = vmatpush1.msra.mxu0 %v228
    %750 = vmatprep.subr.mxu0 %v227
    %751 = vmatpush1.msra.mxu0 %v226
    %752 = vmatprep.subr.mxu0 %v225
    %753 = vmatpush1.msra.mxu0 %v224
    %754 = vmatprep.subr.mxu0 %v223
    %755 = vmatpush1.msra.mxu0 %v222
    %756 = vmatprep.subr.mxu0 %v221
    %757 = vmatpush1.msra.mxu0 %v220
    %758 = vmatprep.subr.mxu0 %v219
    %759 = vmatpush1.msra.mxu0 %v218
    %760 = vmatprep.subr.mxu0 %v217
    %761 = vmatpush1.msra.mxu0 %v216
    %762 = vmatprep.subr.mxu0 %v215
    %763 = vmatpush1.msra.mxu0 %v214
    %764 = vmatprep.subr.mxu0 %v277
    %765 = vmatpush2.msra.mxu0 %v276
    %766 = vmatprep.subr.mxu0 %v275
    %767 = vmatpush2.msra.mxu0 %v274
    %768 = vmatprep.subr.mxu0 %v273
    %769 = vmatpush2.msra.mxu0 %v272
    %770 = vmatprep.subr.mxu0 %v271
    %771 = vmatpush2.msra.mxu0 %v270
    %772 = vmatprep.subr.mxu0 %v269
    %773 = vmatpush2.msra.mxu0 %v268
    %774 = vmatprep.subr.mxu0 %v267
    %775 = vmatpush2.msra.mxu0 %v266
    %776 = vmatprep.subr.mxu0 %v265
    %777 = vmatpush2.msra.mxu0 %v264
    %778 = vmatprep.subr.mxu0 %v263
    %779 = vmatpush2.msra.mxu0 %v262
    %780 = vmatprep.subr.mxu0 %v261
    %781 = vmatpush2.msra.mxu0 %v260
    %782 = vmatprep.subr.mxu0 %v259
    %783 = vmatpush2.msra.mxu0 %v258
    %784 = vmatprep.subr.mxu0 %v257
    %785 = vmatpush2.msra.mxu0 %v256
    %786 = vmatprep.subr.mxu0 %v255
    %787 = vmatpush2.msra.mxu0 %v254
    %788 = vmatprep.subr.mxu0 %v253
    %789 = vmatpush2.msra.mxu0 %v252
    %790 = vmatprep.subr.mxu0 %v251
    %791 = vmatpush2.msra.mxu0 %v250
    %792 = vmatprep.subr.mxu0 %v249
    %793 = vmatpush2.msra.mxu0 %v248
    %794 = vmatprep.subr.mxu0 %v247
    %795 = vmatpush2.msra.mxu0 %v246
    %796 = vmatprep.mubr.f32.mxu0 %v731
    %797 = vmatmul.mubr.f32.gmra.mxu0 %v730
    %v798 = vpop.f32.mrf.mxu0
    %v799 = vadd.f32 1e-05, %v798
    %v800 = vpop.f32.mrf.mxu0
    %v801 = vadd.f32 1e-05, %v800
    %802 = vdwg.mxu0
    %v803 = vrsqrt.pop %v799
    %v804 = vrsqrt.pop %v801
    %v805 = vmul.f32 %v728, %v803
    %v806 = vmul.f32 %v729, %v804
    %v807 = vmul.f32 %v805, %v539
    %v808 = vmul.f32 %v806, %v543
    %v809 = vadd.f32 %v807, %v552
    %v810 = vadd.f32 %v808, %v556
    %v813 = vcombine.low %v809, %v810
    %v815 = vunpack.c.l.s4 1983009808
    %v816 = vunpack.c.0.s8 %v815
    %v817 = vlaneseq
    %v818 = vshrl.u32 %v817, 7
    %v819 = vsub.s32 %v816, %v818
    %v820 = vrot.slane %v813, %v819
    %822 = vst [vmem:[#allocation10] sm:$0xf] %v820
    // Predicated region
    $region50: #{tpu_custom_call.1} parent=1 // pred_check
      _
    $region51: #{tpu_custom_call.1} parent=1 // pred_check_branch
      %824 = sbr.rel (0) target = $region53
    $region52: #{tpu_custom_call.1} parent=1 // pred_region
      %s826 = ssub.s32 64, 64
      %827 = vsyncadd [#allocation4], %s826
      %s829 = sshll.u32 [#allocation10], 4
      %s830 = int_to_ptr.vmem [resolvable:$true] %s829
      %832 = dma.vmem_to_hbm [thread:$0]  %s830, 64, %s8, [#allocation4]
    $region53: #{tpu_custom_call.1} parent=1 // pred_fallthru
      _
    // Predicated region
    $region54: #{tpu_custom_call.1} parent=1 // pred_check
      _
    $region55: #{tpu_custom_call.1} parent=1 // pred_check_branch
      %834 = sbr.rel (0) target = $region57
    $region56: #{tpu_custom_call.1} parent=1 // pred_region
      %835 = dma.done [#allocation4], 64
    $region57: #{tpu_custom_call.1} parent=1 // pred_fallthru
      _
    %836 = vsyncpa [#allocation3], 1
    %837 = vsyncpa [#allocation6], 1
    %838 = vsyncpa [#allocation9], 1
    %839 = vsyncpa [#allocation4], 1

</llo_original>
